<compile_context>
chip_gen: v7x
topology: tpu7x:2x2x1
jax: 0.10.0
libtpu: 0.0.40
codegen_flags: <defaults>
</compile_context>

<pallas_src>
from functools import partial

import jax
import jax.numpy as jnp
from jax.experimental import pallas as pl
from jax.experimental.pallas import tpu as pltpu


# --------------------------------------------------------------------------- kernel
def _policy_kernel(a_dims, compute_dtype, x_ref, w1t_ref, b1_ref, w2t_ref,
                   b2_ref, wht_ref, bh_ref, out_ref):
    """x block is [TB, obs] (natural layout); weights are feature-major transposed."""
    x = x_ref[...].astype(compute_dtype)                      # [TB, obs]
    w1t = w1t_ref[...].astype(compute_dtype)                  # [H1, obs]

    # Layer 1: contract on obs -> [H1, TB]. The rhs transpose is handled by the
    # (idle) XLU, so no wrapper-side x.T / extra HBM pass is needed.
    z1 = jax.lax.dot_general(
        w1t, x, (((1,), (1,)), ((), ())),
        preferred_element_type=jnp.float32) + b1_ref[...]
    h1 = jnp.tanh(z1.astype(compute_dtype))                   # [H1, TB]

    z2 = jnp.dot(w2t_ref[...].astype(compute_dtype), h1,
                 preferred_element_type=jnp.float32) + b2_ref[...]
    h2 = jnp.tanh(z2.astype(compute_dtype))                   # [H2, TB]

    # Fused mean|stddev head: one matmul, one lane-dense [2A, TB] slab (f32).
    z = jnp.dot(wht_ref[...].astype(compute_dtype), h2,
                preferred_element_type=jnp.float32) + bh_ref[...]

    # Rows [0, A) -> mean (identity); rows [A, 2A) -> stddev (stable softplus).
    sp = jnp.maximum(z, 0.0) + jnp.log(1.0 + jnp.exp(-jnp.abs(z)))
    row = jax.lax.broadcasted_iota(jnp.int32, z.shape, 0)
    out_ref[...] = jnp.where(row < a_dims, z, sp)


# ------------------------------------------------------------------ wrapper helpers
def _chip_config():
    """Generation-aware defaults: (bf16_ok, num_tensorcores, default_tb, vmem_limit)."""
    try:
        kind = jax.devices()[0].device_kind.lower()
    except Exception:  # pragma: no cover
        kind = ""
    is_v7 = "v7" in kind
    is_v6 = "v6" in kind
    bf16_ok = is_v6 or is_v7                       # v5e VPU/EUP has no bf16 path
    n_tc = 2 if is_v7 else 1
    if is_v7:
        return bf16_ok, n_tc, 16384, 32 * (1 << 20)   # 64 MiB VMEM chip: stay modest
    if is_v6:
        return bf16_ok, n_tc, 16384, 64 * (1 << 20)
    if "v5" in kind:
        return bf16_ok, n_tc, 8192, 64 * (1 << 20)    # raise the 16 MiB scoped default
    return bf16_ok, n_tc, 8192, None


def _select_tile(B, tb, n_tc):
    """Pick a lane-aligned batch tile; keep grid >= n_tc steps on multi-TC chips."""
    bp128 = pl.cdiv(B, 128) * 128
    tb = max(128, (tb // 128) * 128)
    if n_tc > 1 and bp128 >= n_tc * 128:
        per_core = pl.cdiv(pl.cdiv(bp128, n_tc), 128) * 128
        tb = min(tb, per_core)                     # don't collapse the grid to 1 step
    TB = min(tb, bp128)
    Bp = pl.cdiv(bp128, TB) * TB
    return TB, Bp


def pack_policy_params(params):
    """One-time parameter packing (hoisted out of the per-call path)."""
    return {
        "w1t": params["w1"].T,                                              # [H1, obs]
        "b1": params["b1"].reshape(-1, 1),                                  # [H1, 1]
        "w2t": params["w2"].T,                                              # [H2, H1]
        "b2": params["b2"].reshape(-1, 1),                                  # [H2, 1]
        "wht": jnp.concatenate([params["wm"], params["ws"]], axis=1).T,     # [2A, H2]
        "bh": jnp.concatenate([params["bm"], params["bs"]], axis=0).reshape(-1, 1),
    }


def policy_network_forward(x, packed, *, tb=None, compute_dtype=None,
                           feature_major=False):
    """x: [B, obs] (any float dtype). Returns (mean, std), each [B, A]
    (or feature-major [A, B] slices if feature_major=True, skipping the transpose)."""
    B, obs = x.shape
    H1 = packed["w1t"].shape[0]
    H2 = packed["w2t"].shape[0]
    A2 = packed["wht"].shape[0]
    A = A2 // 2

    bf16_ok, n_tc, default_tb, vmem_limit = _chip_config()
    if tb is None:
        tb = default_tb
    if compute_dtype is None:
        compute_dtype = jnp.bfloat16 if bf16_ok else jnp.float32

    TB, Bp = _select_tile(B, tb, n_tc)

    xf = x.astype(jnp.float32)                    # matches the module's x.float()
    if Bp != B:
        xf = jnp.pad(xf, ((0, Bp - B), (0, 0)))

    grid = (Bp // TB,)

    flops = 2 * Bp * (obs * H1 + H1 * H2 + H2 * A2)
    transcendentals = Bp * (H1 + H2 + A2)         # tanh, tanh, exp
    bytes_accessed = 4 * (Bp * (obs + A2)
                          + H1 * (obs + 1) + H2 * (H1 + 1) + A2 * (H2 + 1))

    extra = {"vmem_limit_bytes": vmem_limit} if vmem_limit else {}
    out = pl.pallas_call(
        partial(_policy_kernel, A, compute_dtype),
        out_shape=jax.ShapeDtypeStruct((A2, Bp), jnp.float32),
        grid=grid,
        in_specs=[
            pl.BlockSpec((TB, obs), lambda i: (i, 0)),   # x: pipelined per batch tile
            pl.BlockSpec((H1, obs), lambda i: (0, 0)),   # weights/biases stay
            pl.BlockSpec((H1, 1), lambda i: (0, 0)),     #   VMEM-resident
            pl.BlockSpec((H2, H1), lambda i: (0, 0)),
            pl.BlockSpec((H2, 1), lambda i: (0, 0)),
            pl.BlockSpec((A2, H2), lambda i: (0, 0)),
            pl.BlockSpec((A2, 1), lambda i: (0, 0)),
        ],
        out_specs=pl.BlockSpec((A2, TB), lambda i: (0, i)),
        compiler_params=pltpu.CompilerParams(
            dimension_semantics=("parallel",),           # megacore batch sharding (v7x)
            **extra,
        ),
        cost_estimate=pl.CostEstimate(
            flops=flops, transcendentals=transcendentals,
            bytes_accessed=bytes_accessed),
    )(xf, packed["w1t"], packed["b1"], packed["w2t"], packed["b2"],
      packed["wht"], packed["bh"])

    if feature_major:
        return out[:A, :B], out[A:, :B]
    return out[:A, :B].T, out[A:, :B].T


# ----------------------------------------------------------------------- utilities
def init_params(key, obs_space_dims, action_space_dims):
    """nn.Linear-style init: U(-1/sqrt(fan_in), 1/sqrt(fan_in)) for W and b."""
    h1, h2 = 16, 32
    layers = {
        "1": (obs_space_dims, h1),
        "2": (h1, h2),
        "m": (h2, action_space_dims),
        "s": (h2, action_space_dims),
    }
    params = {}
    for tag, (fan_in, fan_out) in layers.items():
        key, kw, kb = jax.random.split(key, 3)
        bound = 1.0 / (float(fan_in) ** 0.5)
        params["w" + tag] = jax.random.uniform(
            kw, (fan_in, fan_out), jnp.float32, minval=-bound, maxval=bound)
        params["b" + tag] = jax.random.uniform(
            kb, (fan_out,), jnp.float32, minval=-bound, maxval=bound)
    return params


def _reference(x, params):
    h1 = jnp.tanh(x @ params["w1"] + params["b1"])
    h2 = jnp.tanh(h1 @ params["w2"] + params["b2"])
    mean = h2 @ params["wm"] + params["bm"]
    std = jnp.log(1.0 + jnp.exp(h2 @ params["ws"] + params["bs"]))
    return mean, std


if __name__ == "__main__":
    key = jax.random.PRNGKey(0)
    obs_space_dims, action_space_dims = 4, 2

    key, pkey, xkey1, xkey2 = jax.random.split(key, 4)
    params = init_params(pkey, obs_space_dims, action_space_dims)
    packed = pack_policy_params(params)          # one-time packing, not per call

    fwd = jax.jit(policy_network_forward,
                  static_argnames=("tb", "compute_dtype", "feature_major"))

    # 1) Small single-tile case, f32 activations, tight tolerance.
    x_small = jax.random.normal(xkey1, (8, obs_space_dims), dtype=jnp.float32)
    mean, std = fwd(x_small, packed, compute_dtype=jnp.float32)
    jax.block_until_ready((mean, std))
    rm, rs = _reference(x_small, params)
    assert mean.shape == (8, action_space_dims) and std.shape == (8, action_space_dims)
    assert jnp.allclose(mean, rm, atol=1e-5), "mean mismatch (small)"
    assert jnp.allclose(std, rs, atol=1e-5), "stddev mismatch (small)"

    # 2) Tiled + padded batch (exercises multi-step grid / parallel batch axis), f32.
    x_big = jax.random.normal(xkey2, (260, obs_space_dims), dtype=jnp.float32)
    mean2, std2 = fwd(x_big, packed, tb=128, compute_dtype=jnp.float32)
    jax.block_until_ready((mean2, std2))
    rm2, rs2 = _reference(x_big, params)
    assert mean2.shape == (260, action_space_dims)
    assert jnp.allclose(mean2, rm2, atol=1e-5), "mean mismatch (tiled)"
    assert jnp.allclose(std2, rs2, atol=1e-5), "stddev mismatch (tiled)"

    # 3) Auto configuration (bf16 activations on v6e/v7x, f32 elsewhere): loose check.
    mean3, std3 = fwd(x_big, packed)
    jax.block_until_ready((mean3, std3))
    assert mean3.shape == (260, action_space_dims)
    assert jnp.allclose(mean3, rm2, atol=1e-1, rtol=1e-1), "mean mismatch (auto)"
    assert jnp.allclose(std3, rs2, atol=1e-1, rtol=1e-1), "stddev mismatch (auto)"

    print("KERNEL_OK")
</pallas_src>

<mosaic_0001>
module attributes {stable_mosaic.version = 11 : i64} {
  func.func @_policy_kernel(%arg0: i32, %arg1: memref<128x4xf32, #tpu.memory_space<vmem>>, %arg2: memref<16x4xf32, #tpu.memory_space<vmem>>, %arg3: memref<16x1xf32, #tpu.memory_space<vmem>>, %arg4: memref<32x16xf32, #tpu.memory_space<vmem>>, %arg5: memref<32x1xf32, #tpu.memory_space<vmem>>, %arg6: memref<4x32xf32, #tpu.memory_space<vmem>>, %arg7: memref<4x1xf32, #tpu.memory_space<vmem>>, %arg8: memref<4x128xf32, #tpu.memory_space<vmem>>) attributes {dimension_semantics = [#tpu.dimension_semantics<parallel>], iteration_bounds = array<i64: 1>, scalar_prefetch = 0 : i64, scratch_operands = 0 : i64, tpu.core_type = #tpu.core_type<tc>, window_params = [{transform_indices = @transform_0, window_bounds = array<i64: 128, 4>}, {pipeline_mode = #tpu.pipeline_mode<synchronous>, transform_indices = @transform_1, window_bounds = array<i64: 16, 4>}, {pipeline_mode = #tpu.pipeline_mode<synchronous>, transform_indices = @transform_2, window_bounds = array<i64: 16, 1>}, {pipeline_mode = #tpu.pipeline_mode<synchronous>, transform_indices = @transform_3, window_bounds = array<i64: 32, 16>}, {pipeline_mode = #tpu.pipeline_mode<synchronous>, transform_indices = @transform_4, window_bounds = array<i64: 32, 1>}, {pipeline_mode = #tpu.pipeline_mode<synchronous>, transform_indices = @transform_5, window_bounds = array<i64: 4, 32>}, {pipeline_mode = #tpu.pipeline_mode<synchronous>, transform_indices = @transform_6, window_bounds = array<i64: 4, 1>}, {transform_indices = @transform_7, window_bounds = array<i64: 4, 128>}]} {
    %c0 = arith.constant 0 : index
    %c0_0 = arith.constant 0 : index
    %0 = vector.load %arg1[%c0, %c0_0] : memref<128x4xf32, #tpu.memory_space<vmem>>, vector<128x4xf32>
    %c0_1 = arith.constant 0 : index
    %c0_2 = arith.constant 0 : index
    %1 = vector.load %arg2[%c0_1, %c0_2] : memref<16x4xf32, #tpu.memory_space<vmem>>, vector<16x4xf32>
    %cst = arith.constant dense<0.000000e+00> : vector<16x128xf32>
    %2 = tpu.matmul %1, %0, %cst {dimension_numbers = #tpu.dot_dimension_numbers<[1], [1], [0], [0], [0, 0, 1, 0], [], []>} : vector<16x4xf32>, vector<128x4xf32>, vector<16x128xf32> -> vector<16x128xf32>
    %c0_3 = arith.constant 0 : index
    %c0_4 = arith.constant 0 : index
    %3 = vector.load %arg3[%c0_3, %c0_4] : memref<16x1xf32, #tpu.memory_space<vmem>>, vector<16x1xf32>
    %4 = vector.broadcast %3 : vector<16x1xf32> to vector<16x128xf32>
    %5 = arith.addf %2, %4 : vector<16x128xf32>
    %6 = math.tanh %5 : vector<16x128xf32>
    %c0_5 = arith.constant 0 : index
    %c0_6 = arith.constant 0 : index
    %7 = vector.load %arg4[%c0_5, %c0_6] : memref<32x16xf32, #tpu.memory_space<vmem>>, vector<32x16xf32>
    %cst_7 = arith.constant dense<0.000000e+00> : vector<32x128xf32>
    %8 = tpu.matmul %7, %6, %cst_7 {dimension_numbers = #tpu.dot_dimension_numbers<[1], [0], [0], [1], [0, 0, 1, 1], [], []>} : vector<32x16xf32>, vector<16x128xf32>, vector<32x128xf32> -> vector<32x128xf32>
    %c0_8 = arith.constant 0 : index
    %c0_9 = arith.constant 0 : index
    %9 = vector.load %arg5[%c0_8, %c0_9] : memref<32x1xf32, #tpu.memory_space<vmem>>, vector<32x1xf32>
    %10 = vector.broadcast %9 : vector<32x1xf32> to vector<32x128xf32>
    %11 = arith.addf %8, %10 : vector<32x128xf32>
    %12 = math.tanh %11 : vector<32x128xf32>
    %c0_10 = arith.constant 0 : index
    %c0_11 = arith.constant 0 : index
    %13 = vector.load %arg6[%c0_10, %c0_11] : memref<4x32xf32, #tpu.memory_space<vmem>>, vector<4x32xf32>
    %cst_12 = arith.constant dense<0.000000e+00> : vector<4x128xf32>
    %14 = tpu.matmul %13, %12, %cst_12 {dimension_numbers = #tpu.dot_dimension_numbers<[1], [0], [0], [1], [0, 0, 1, 1], [], []>} : vector<4x32xf32>, vector<32x128xf32>, vector<4x128xf32> -> vector<4x128xf32>
    %c0_13 = arith.constant 0 : index
    %c0_14 = arith.constant 0 : index
    %15 = vector.load %arg7[%c0_13, %c0_14] : memref<4x1xf32, #tpu.memory_space<vmem>>, vector<4x1xf32>
    %16 = vector.broadcast %15 : vector<4x1xf32> to vector<4x128xf32>
    %17 = arith.addf %14, %16 : vector<4x128xf32>
    %cst_15 = arith.constant 0.000000e+00 : f32
    %18 = vector.broadcast %cst_15 : f32 to vector<4x128xf32>
    %19 = arith.maximumf %17, %18 : vector<4x128xf32>
    %20 = math.absf %17 : vector<4x128xf32>
    %cst_16 = arith.constant 0.000000e+00 : f32
    %21 = vector.broadcast %cst_16 : f32 to vector<4x128xf32>
    %22 = arith.subf %21, %20 : vector<4x128xf32>
    %23 = math.exp %22 : vector<4x128xf32>
    %cst_17 = arith.constant 1.000000e+00 : f32
    %24 = vector.broadcast %cst_17 : f32 to vector<4x128xf32>
    %25 = arith.addf %24, %23 : vector<4x128xf32>
    %26 = math.log %25 : vector<4x128xf32>
    %27 = arith.addf %19, %26 : vector<4x128xf32>
    %28 = tpu.iota {dimensions = array<i32: 0>} : vector<4x128xi32>
    %c2_i32 = arith.constant 2 : i32
    %29 = vector.broadcast %c2_i32 : i32 to vector<4x128xi32>
    %30 = arith.cmpi slt, %28, %29 : vector<4x128xi32>
    %31 = arith.select %30, %17, %27 : vector<4x128xi1>, vector<4x128xf32>
    %c0_18 = arith.constant 0 : index
    %c0_19 = arith.constant 0 : index
    %32 = vector.load %arg8[%c0_18, %c0_19] : memref<4x128xf32, #tpu.memory_space<vmem>>, vector<4x128xf32>
    tpu.vector_store %arg8[%c0_18, %c0_19], %31 {strides = array<i32>} : memref<4x128xf32, #tpu.memory_space<vmem>>, vector<4x128xf32>,
    return
  }
  func.func @transform_0(%arg0: i32) -> (i32, i32) {
    %c0_i32 = arith.constant 0 : i32
    %c0_i32_0 = arith.constant 0 : i32
    return %arg0, %c0_i32 : i32, i32
  }
  func.func @transform_1(%arg0: i32) -> (i32, i32) {
    %c0_i32 = arith.constant 0 : i32
    %c0_i32_0 = arith.constant 0 : i32
    %c0_i32_1 = arith.constant 0 : i32
    return %c0_i32, %c0_i32_0 : i32, i32
  }
  func.func @transform_2(%arg0: i32) -> (i32, i32) {
    %c0_i32 = arith.constant 0 : i32
    %c0_i32_0 = arith.constant 0 : i32
    %c0_i32_1 = arith.constant 0 : i32
    return %c0_i32, %c0_i32_0 : i32, i32
  }
  func.func @transform_3(%arg0: i32) -> (i32, i32) {
    %c0_i32 = arith.constant 0 : i32
    %c0_i32_0 = arith.constant 0 : i32
    %c0_i32_1 = arith.constant 0 : i32
    return %c0_i32, %c0_i32_0 : i32, i32
  }
  func.func @transform_4(%arg0: i32) -> (i32, i32) {
    %c0_i32 = arith.constant 0 : i32
    %c0_i32_0 = arith.constant 0 : i32
    %c0_i32_1 = arith.constant 0 : i32
    return %c0_i32, %c0_i32_0 : i32, i32
  }
  func.func @transform_5(%arg0: i32) -> (i32, i32) {
    %c0_i32 = arith.constant 0 : i32
    %c0_i32_0 = arith.constant 0 : i32
    %c0_i32_1 = arith.constant 0 : i32
    return %c0_i32, %c0_i32_0 : i32, i32
  }
  func.func @transform_6(%arg0: i32) -> (i32, i32) {
    %c0_i32 = arith.constant 0 : i32
    %c0_i32_0 = arith.constant 0 : i32
    %c0_i32_1 = arith.constant 0 : i32
    return %c0_i32, %c0_i32_0 : i32, i32
  }
  func.func @transform_7(%arg0: i32) -> (i32, i32) {
    %c0_i32 = arith.constant 0 : i32
    %c0_i32_0 = arith.constant 0 : i32
    return %c0_i32, %arg0 : i32, i32
  }
}

</mosaic_0001>

<llo_original>
// kernel: policy_network_forward.1
$region0: #{policy_network_forward.1}
  #allocation0 [shape = 'u32[]', space=smem, size = 0x4, offset = 0x4, fixed_abs, tag = 'smem constant byte address 0x4 - core index']
  #allocation1 [shape = 'u32[144,128]{1,0:T(1,128)}', space=vmem, size = 0x12000, scoped, tag = 'internal scratch']
  %s0 = inlined_call_operand.vmem [shape: f32[128,4], index: 0, kind: input, shape index: {}]
  %s1 = inlined_call_operand.vmem [shape: f32[16,4], index: 1, kind: input, shape index: {}]
  %s2 = inlined_call_operand.vmem [shape: f32[16,1], index: 2, kind: input, shape index: {}]
  %s3 = inlined_call_operand.vmem [shape: f32[32,16], index: 3, kind: input, shape index: {}]
  %s4 = inlined_call_operand.vmem [shape: f32[32,1], index: 4, kind: input, shape index: {}]
  %s5 = inlined_call_operand.vmem [shape: f32[4,32], index: 5, kind: input, shape index: {}]
  %s6 = inlined_call_operand.vmem [shape: f32[4,1], index: 6, kind: input, shape index: {}]
  %s7 = inlined_call_operand.vmem [shape: f32[4,128], index: 7, kind: output, shape index: {}]
  %s8 = sld [smem:[#allocation0]]
  $region38: #{policy_network_forward.1} parent=0
    _
  %s10 = ssub.s32 1, %s8
  %s11 = scalar_select 0, %s10, %s8
  // Predicated region
  $region2: #{policy_network_forward.1} parent=0 // pred_check
    _
  $region3: #{policy_network_forward.1} parent=0 // pred_check_branch
    %13 = sbr.rel (0) target = $region5
  $region4: #{policy_network_forward.1} parent=0 // pred_region
    _
  $region5: #{policy_network_forward.1} parent=0 // pred_fallthru
    _
  // Predicated region
  $region6: #{policy_network_forward.1} parent=0 // pred_check
    _
  $region7: #{policy_network_forward.1} parent=0 // pred_check_branch
    %15 = sbr.rel (0) target = $region9
  $region8: #{policy_network_forward.1} parent=0 // pred_region
    _
  $region9: #{policy_network_forward.1} parent=0 // pred_fallthru
    _
  // Predicated region
  $region10: #{policy_network_forward.1} parent=0 // pred_check
    _
  $region11: #{policy_network_forward.1} parent=0 // pred_check_branch
    %17 = sbr.rel (0) target = $region13
  $region12: #{policy_network_forward.1} parent=0 // pred_region
    _
  $region13: #{policy_network_forward.1} parent=0 // pred_fallthru
    _
  // Predicated region
  $region14: #{policy_network_forward.1} parent=0 // pred_check
    _
  $region15: #{policy_network_forward.1} parent=0 // pred_check_branch
    %19 = sbr.rel (0) target = $region17
  $region16: #{policy_network_forward.1} parent=0 // pred_region
    _
  $region17: #{policy_network_forward.1} parent=0 // pred_fallthru
    _
  // Predicated region
  $region18: #{policy_network_forward.1} parent=0 // pred_check
    _
  $region19: #{policy_network_forward.1} parent=0 // pred_check_branch
    %21 = sbr.rel (0) target = $region21
  $region20: #{policy_network_forward.1} parent=0 // pred_region
    _
  $region21: #{policy_network_forward.1} parent=0 // pred_fallthru
    _
  // Predicated region
  $region22: #{policy_network_forward.1} parent=0 // pred_check
    _
  $region23: #{policy_network_forward.1} parent=0 // pred_check_branch
    %23 = sbr.rel (0) target = $region25
  $region24: #{policy_network_forward.1} parent=0 // pred_region
    _
  $region25: #{policy_network_forward.1} parent=0 // pred_fallthru
    _
  // Predicated region
  $region26: #{policy_network_forward.1} parent=0 // pred_check
    _
  $region27: #{policy_network_forward.1} parent=0 // pred_check_branch
    %25 = sbr.rel (0) target = $region29
  $region28: #{policy_network_forward.1} parent=0 // pred_region
    _
  $region29: #{policy_network_forward.1} parent=0 // pred_fallthru
    _
  %v26 = vld [vmem:[%s0] sm:$0xff]
  %v27 = vld [vmem:[%s0 + $0x8] sm:$0xff]
  %v28 = vld [vmem:[%s0 + $0x10] sm:$0xff]
  %v29 = vld [vmem:[%s0 + $0x18] sm:$0xff]
  %v30 = vld [vmem:[%s0 + $0x20] sm:$0xff]
  %v31 = vld [vmem:[%s0 + $0x28] sm:$0xff]
  %v32 = vld [vmem:[%s0 + $0x30] sm:$0xff]
  %v33 = vld [vmem:[%s0 + $0x38] sm:$0xff]
  %v34 = vld [vmem:[%s0 + $0x40] sm:$0xff]
  %v35 = vld [vmem:[%s0 + $0x48] sm:$0xff]
  %v36 = vld [vmem:[%s0 + $0x50] sm:$0xff]
  %v37 = vld [vmem:[%s0 + $0x58] sm:$0xff]
  %v38 = vld [vmem:[%s0 + $0x60] sm:$0xff]
  %v39 = vld [vmem:[%s0 + $0x68] sm:$0xff]
  %v40 = vld [vmem:[%s0 + $0x70] sm:$0xff]
  %v41 = vld [vmem:[%s0 + $0x78] sm:$0xff]
  %v42 = vld [vmem:[%s1] sm:$0xff]
  %v43 = vld [vmem:[%s1 + $0x8] sm:$0xff]
  %v44 = vld [vmem:[%s2] sm:$0xff]
  %v45 = vld [vmem:[%s2 + $0x8] sm:$0xff]
  %47 = vset.pattern.permute.xlu0 0
  %48 = vperm.xlu0 %47, %v44
  %v49 = vpop.permute.xlu0 %48
  %52 = vset.pattern.permute.xlu0 0
  %53 = vperm.xlu0 %52, %v45
  %v54 = vpop.permute.xlu0 %53
  %vm56 = vcmask 31744
  %v58 = vsel %vm56, %v42, 0
  %v61 = vsel %vm56, %v43, 0
  %v64 = vsel %vm56, %v26, 0
  %v67 = vsel %vm56, %v27, 0
  %v70 = vsel %vm56, %v28, 0
  %v73 = vsel %vm56, %v29, 0
  %v76 = vsel %vm56, %v30, 0
  %v79 = vsel %vm56, %v31, 0
  %v82 = vsel %vm56, %v32, 0
  %v85 = vsel %vm56, %v33, 0
  %v88 = vsel %vm56, %v34, 0
  %v91 = vsel %vm56, %v35, 0
  %v94 = vsel %vm56, %v36, 0
  %v97 = vsel %vm56, %v37, 0
  %v100 = vsel %vm56, %v38, 0
  %v103 = vsel %vm56, %v39, 0
  %v106 = vsel %vm56, %v40, 0
  %v109 = vsel %vm56, %v41, 0
  %111 = vmatprep.subr.mxu0 0.0
  %112 = vmatpush1.xpose.msra.mxu0 %v64
  %113 = vmatprep.subr.mxu0 0.0
  %114 = vmatpush1.xpose.msra.mxu0 %v67
  %115 = vmatprep.subr.mxu0 0.0
  %116 = vmatpush1.xpose.msra.mxu0 %v70
  %117 = vmatprep.subr.mxu0 0.0
  %118 = vmatpush1.xpose.msra.mxu0 %v73
  %119 = vmatprep.subr.mxu0 0.0
  %120 = vmatpush1.xpose.msra.mxu0 %v76
  %121 = vmatprep.subr.mxu0 0.0
  %122 = vmatpush1.xpose.msra.mxu0 %v79
  %123 = vmatprep.subr.mxu0 0.0
  %124 = vmatpush1.xpose.msra.mxu0 %v82
  %125 = vmatprep.subr.mxu0 0.0
  %126 = vmatpush1.xpose.msra.mxu0 %v85
  %127 = vmatprep.subr.mxu0 0.0
  %128 = vmatpush1.xpose.msra.mxu0 %v88
  %129 = vmatprep.subr.mxu0 0.0
  %130 = vmatpush1.xpose.msra.mxu0 %v91
  %131 = vmatprep.subr.mxu0 0.0
  %132 = vmatpush1.xpose.msra.mxu0 %v94
  %133 = vmatprep.subr.mxu0 0.0
  %134 = vmatpush1.xpose.msra.mxu0 %v97
  %135 = vmatprep.subr.mxu0 0.0
  %136 = vmatpush1.xpose.msra.mxu0 %v100
  %137 = vmatprep.subr.mxu0 0.0
  %138 = vmatpush1.xpose.msra.mxu0 %v103
  %139 = vmatprep.subr.mxu0 0.0
  %140 = vmatpush1.xpose.msra.mxu0 %v106
  %141 = vmatprep.subr.mxu0 0.0
  %142 = vmatpush1.xpose.msra.mxu0 %v109
  %143 = vmatprep.subr.mxu0 0.0
  %144 = vmatpush1.xpose.msra.mxu0 0.0
  %145 = vmatprep.subr.mxu0 0.0
  %146 = vmatpush1.xpose.msra.mxu0 0.0
  %147 = vmatprep.subr.mxu0 0.0
  %148 = vmatpush1.xpose.msra.mxu0 0.0
  %149 = vmatprep.subr.mxu0 0.0
  %150 = vmatpush1.xpose.msra.mxu0 0.0
  %151 = vmatprep.subr.mxu0 0.0
  %152 = vmatpush1.xpose.msra.mxu0 0.0
  %153 = vmatprep.subr.mxu0 0.0
  %154 = vmatpush1.xpose.msra.mxu0 0.0
  %155 = vmatprep.subr.mxu0 0.0
  %156 = vmatpush1.xpose.msra.mxu0 0.0
  %157 = vmatprep.subr.mxu0 0.0
  %158 = vmatpush1.xpose.msra.mxu0 0.0
  %159 = vmatprep.subr.mxu0 0.0
  %160 = vmatpush1.xpose.msra.mxu0 0.0
  %161 = vmatprep.subr.mxu0 0.0
  %162 = vmatpush1.xpose.msra.mxu0 0.0
  %163 = vmatprep.subr.mxu0 0.0
  %164 = vmatpush1.xpose.msra.mxu0 0.0
  %165 = vmatprep.subr.mxu0 0.0
  %166 = vmatpush1.xpose.msra.mxu0 0.0
  %167 = vmatprep.subr.mxu0 0.0
  %168 = vmatpush1.xpose.msra.mxu0 0.0
  %169 = vmatprep.subr.mxu0 0.0
  %170 = vmatpush1.xpose.msra.mxu0 0.0
  %171 = vmatprep.subr.mxu0 0.0
  %172 = vmatpush1.xpose.msra.mxu0 0.0
  %173 = vmatprep.subr.mxu0 0.0
  %174 = vmatpush1.xpose.msra.mxu0 0.0
  %175 = vmatprep.mubr.f32.mxu0 0.0
  %176 = vmatmul.mubr.f32.gmra.mrb[0].mxu0 %v58
  %v177 = vpop.f32.mrb[0].mxu0
  %v178 = vadd.f32 %v49, %v177
  %v179 = vpop.f32.mrb[0].mxu0
  %180 = vmatprep.mubr.f32.mxu0 0.0
  %181 = vmatmul.mubr.f32.gmra.mrb[0].mxu0 %v61
  %v182 = vpop.f32.mrb[0].mxu0
  %v183 = vadd.f32 %v54, %v182
  %v184 = vpop.f32.mrb[0].mxu0
  %185 = vdwg.mxu0
  %v186 = vtanh.pop %v178
  %v187 = vtanh.pop %v183
  %v188 = vld [vmem:[%s3] sm:$0xff]
  %v189 = vld [vmem:[%s3 + $0x8] sm:$0xff]
  %v190 = vld [vmem:[%s3 + $0x10] sm:$0xff]
  %v191 = vld [vmem:[%s3 + $0x18] sm:$0xff]
  %v192 = vld [vmem:[%s4] sm:$0xff]
  %v193 = vld [vmem:[%s4 + $0x8] sm:$0xff]
  %v194 = vld [vmem:[%s4 + $0x10] sm:$0xff]
  %v195 = vld [vmem:[%s4 + $0x18] sm:$0xff]
  %197 = vset.pattern.permute.xlu0 0
  %198 = vperm.xlu0 %197, %v192
  %v199 = vpop.permute.xlu0 %198
  %202 = vset.pattern.permute.xlu0 0
  %203 = vperm.xlu0 %202, %v193
  %v204 = vpop.permute.xlu0 %203
  %207 = vset.pattern.permute.xlu0 0
  %208 = vperm.xlu0 %207, %v194
  %v209 = vpop.permute.xlu0 %208
  %212 = vset.pattern.permute.xlu0 0
  %213 = vperm.xlu0 %212, %v195
  %v214 = vpop.permute.xlu0 %213
  %vm216 = vcmask 130048
  %v218 = vsel %vm216, %v188, 0
  %v221 = vsel %vm216, %v189, 0
  %v224 = vsel %vm216, %v190, 0
  %v227 = vsel %vm216, %v191, 0
  %229 = vmatprep.subr.mxu0 0.0
  %230 = vmatpush1.msra.mxu0 %v186
  %231 = vmatprep.subr.mxu0 0.0
  %232 = vmatpush1.msra.mxu0 %v187
  %233 = vmatprep.subr.mxu0 0.0
  %234 = vmatpush1.msra.mxu0 0.0
  %235 = vmatprep.subr.mxu0 0.0
  %236 = vmatpush1.msra.mxu0 0.0
  %237 = vmatprep.subr.mxu0 0.0
  %238 = vmatpush1.msra.mxu0 0.0
  %239 = vmatprep.subr.mxu0 0.0
  %240 = vmatpush1.msra.mxu0 0.0
  %241 = vmatprep.subr.mxu0 0.0
  %242 = vmatpush1.msra.mxu0 0.0
  %243 = vmatprep.subr.mxu0 0.0
  %244 = vmatpush1.msra.mxu0 0.0
  %245 = vmatprep.subr.mxu0 0.0
  %246 = vmatpush1.msra.mxu0 0.0
  %247 = vmatprep.subr.mxu0 0.0
  %248 = vmatpush1.msra.mxu0 0.0
  %249 = vmatprep.subr.mxu0 0.0
  %250 = vmatpush1.msra.mxu0 0.0
  %251 = vmatprep.subr.mxu0 0.0
  %252 = vmatpush1.msra.mxu0 0.0
  %253 = vmatprep.subr.mxu0 0.0
  %254 = vmatpush1.msra.mxu0 0.0
  %255 = vmatprep.subr.mxu0 0.0
  %256 = vmatpush1.msra.mxu0 0.0
  %257 = vmatprep.subr.mxu0 0.0
  %258 = vmatpush1.msra.mxu0 0.0
  %259 = vmatprep.subr.mxu0 0.0
  %260 = vmatpush1.msra.mxu0 0.0
  %261 = vmatprep.subr.mxu0 0.0
  %262 = vmatpush1.msra.mxu0 0.0
  %263 = vmatprep.subr.mxu0 0.0
  %264 = vmatpush1.msra.mxu0 0.0
  %265 = vmatprep.subr.mxu0 0.0
  %266 = vmatpush1.msra.mxu0 0.0
  %267 = vmatprep.subr.mxu0 0.0
  %268 = vmatpush1.msra.mxu0 0.0
  %269 = vmatprep.subr.mxu0 0.0
  %270 = vmatpush1.msra.mxu0 0.0
  %271 = vmatprep.subr.mxu0 0.0
  %272 = vmatpush1.msra.mxu0 0.0
  %273 = vmatprep.subr.mxu0 0.0
  %274 = vmatpush1.msra.mxu0 0.0
  %275 = vmatprep.subr.mxu0 0.0
  %276 = vmatpush1.msra.mxu0 0.0
  %277 = vmatprep.subr.mxu0 0.0
  %278 = vmatpush1.msra.mxu0 0.0
  %279 = vmatprep.subr.mxu0 0.0
  %280 = vmatpush1.msra.mxu0 0.0
  %281 = vmatprep.subr.mxu0 0.0
  %282 = vmatpush1.msra.mxu0 0.0
  %283 = vmatprep.subr.mxu0 0.0
  %284 = vmatpush1.msra.mxu0 0.0
  %285 = vmatprep.subr.mxu0 0.0
  %286 = vmatpush1.msra.mxu0 0.0
  %287 = vmatprep.subr.mxu0 0.0
  %288 = vmatpush1.msra.mxu0 0.0
  %289 = vmatprep.subr.mxu0 0.0
  %290 = vmatpush1.msra.mxu0 0.0
  %291 = vmatprep.subr.mxu0 0.0
  %292 = vmatpush1.msra.mxu0 0.0
  %293 = vmatprep.mubr.f32.mxu0 0.0
  %294 = vmatmul.mubr.f32.gmra.mrb[0].mxu0 %v218
  %v295 = vpop.f32.mrb[0].mxu0
  %v296 = vadd.f32 %v199, %v295
  %v297 = vpop.f32.mrb[0].mxu0
  %298 = vmatprep.mubr.f32.mxu0 0.0
  %299 = vmatmul.mubr.f32.gmra.mrb[0].mxu0 %v221
  %v300 = vpop.f32.mrb[0].mxu0
  %v301 = vadd.f32 %v204, %v300
  %v302 = vpop.f32.mrb[0].mxu0
  %303 = vmatprep.mubr.f32.mxu0 0.0
  %304 = vmatmul.mubr.f32.gmra.mrb[0].mxu0 %v224
  %v305 = vpop.f32.mrb[0].mxu0
  %v306 = vadd.f32 %v209, %v305
  %v307 = vpop.f32.mrb[0].mxu0
  %308 = vmatprep.mubr.f32.mxu0 0.0
  %309 = vmatmul.mubr.f32.gmra.mrb[0].mxu0 %v227
  %v310 = vpop.f32.mrb[0].mxu0
  %v311 = vadd.f32 %v214, %v310
  %v312 = vpop.f32.mrb[0].mxu0
  %313 = vdwg.mxu0
  %v314 = vtanh.pop %v296
  %v315 = vtanh.pop %v301
  %v316 = vtanh.pop %v306
  %v317 = vtanh.pop %v311
  %v318 = vld [vmem:[%s5] sm:$0xf]
  %v319 = vld [vmem:[%s6] sm:$0xf]
  %321 = vset.pattern.permute.xlu0 0
  %322 = vperm.xlu0 %321, %v319
  %v323 = vpop.permute.xlu0 %322
  %vm325 = vcmask 261120
  %v327 = vsel %vm325, %v318, 0
  %329 = vmatprep.subr.mxu0 0.0
  %330 = vmatpush1.msra.mxu0 %v314
  %331 = vmatprep.subr.mxu0 0.0
  %332 = vmatpush1.msra.mxu0 %v315
  %333 = vmatprep.subr.mxu0 0.0
  %334 = vmatpush1.msra.mxu0 %v316
  %335 = vmatprep.subr.mxu0 0.0
  %336 = vmatpush1.msra.mxu0 %v317
  %337 = vmatprep.subr.mxu0 0.0
  %338 = vmatpush1.msra.mxu0 0.0
  %339 = vmatprep.subr.mxu0 0.0
  %340 = vmatpush1.msra.mxu0 0.0
  %341 = vmatprep.subr.mxu0 0.0
  %342 = vmatpush1.msra.mxu0 0.0
  %343 = vmatprep.subr.mxu0 0.0
  %344 = vmatpush1.msra.mxu0 0.0
  %345 = vmatprep.subr.mxu0 0.0
  %346 = vmatpush1.msra.mxu0 0.0
  %347 = vmatprep.subr.mxu0 0.0
  %348 = vmatpush1.msra.mxu0 0.0
  %349 = vmatprep.subr.mxu0 0.0
  %350 = vmatpush1.msra.mxu0 0.0
  %351 = vmatprep.subr.mxu0 0.0
  %352 = vmatpush1.msra.mxu0 0.0
  %353 = vmatprep.subr.mxu0 0.0
  %354 = vmatpush1.msra.mxu0 0.0
  %355 = vmatprep.subr.mxu0 0.0
  %356 = vmatpush1.msra.mxu0 0.0
  %357 = vmatprep.subr.mxu0 0.0
  %358 = vmatpush1.msra.mxu0 0.0
  %359 = vmatprep.subr.mxu0 0.0
  %360 = vmatpush1.msra.mxu0 0.0
  %361 = vmatprep.subr.mxu0 0.0
  %362 = vmatpush1.msra.mxu0 0.0
  %363 = vmatprep.subr.mxu0 0.0
  %364 = vmatpush1.msra.mxu0 0.0
  %365 = vmatprep.subr.mxu0 0.0
  %366 = vmatpush1.msra.mxu0 0.0
  %367 = vmatprep.subr.mxu0 0.0
  %368 = vmatpush1.msra.mxu0 0.0
  %369 = vmatprep.subr.mxu0 0.0
  %370 = vmatpush1.msra.mxu0 0.0
  %371 = vmatprep.subr.mxu0 0.0
  %372 = vmatpush1.msra.mxu0 0.0
  %373 = vmatprep.subr.mxu0 0.0
  %374 = vmatpush1.msra.mxu0 0.0
  %375 = vmatprep.subr.mxu0 0.0
  %376 = vmatpush1.msra.mxu0 0.0
  %377 = vmatprep.subr.mxu0 0.0
  %378 = vmatpush1.msra.mxu0 0.0
  %379 = vmatprep.subr.mxu0 0.0
  %380 = vmatpush1.msra.mxu0 0.0
  %381 = vmatprep.subr.mxu0 0.0
  %382 = vmatpush1.msra.mxu0 0.0
  %383 = vmatprep.subr.mxu0 0.0
  %384 = vmatpush1.msra.mxu0 0.0
  %385 = vmatprep.subr.mxu0 0.0
  %386 = vmatpush1.msra.mxu0 0.0
  %387 = vmatprep.subr.mxu0 0.0
  %388 = vmatpush1.msra.mxu0 0.0
  %389 = vmatprep.subr.mxu0 0.0
  %390 = vmatpush1.msra.mxu0 0.0
  %391 = vmatprep.subr.mxu0 0.0
  %392 = vmatpush1.msra.mxu0 0.0
  %393 = vmatprep.mubr.f32.mxu0 0.0
  %394 = vmatmul.mubr.f32.gmra.mrb[0].mxu0 %v327
  %v395 = vpop.f32.mrb[0].mxu0
  %v396 = vadd.f32 %v323, %v395
  %v397 = vpop.f32.mrb[0].mxu0
  %398 = vdwg.mxu0
  %v399 = vmax.f32 %v396, 0.0
  %v400 = vand.u32 2147483647, %v396
  %v401 = vsub.f32 0.0, %v400
  %v402 = vmul.f32 %v401, 1.442695
  %v403 = vpow.pop %v402
  %v404 = vadd.f32 %v403, 1.0
  %v405 = vlog2.pop %v404
  %v406 = vmul.f32 %v405, 0.6931472
  %v407 = vadd.f32 %v399, %v406
  %v408 = vlaneseq
  %v409 = vshrl.u32 %v408, 7
  %vm410 = vcmp.lt.s32.totalorder %v409, 2
  %v411 = vsel %vm410, %v396, %v407
  %412 = vst [vmem:[%s7] sm:$0xf] %v411
  // Predicated region
  $region30: #{policy_network_forward.1} parent=0 // pred_check
    _
  $region31: #{policy_network_forward.1} parent=0 // pred_check_branch
    %414 = sbr.rel (0) target = $region33
  $region32: #{policy_network_forward.1} parent=0 // pred_region
    _
  $region33: #{policy_network_forward.1} parent=0 // pred_fallthru
    _
  // Predicated region
  $region34: #{policy_network_forward.1} parent=0 // pred_check
    _
  $region35: #{policy_network_forward.1} parent=0 // pred_check_branch
    %416 = sbr.rel (0) target = $region37
  $region36: #{policy_network_forward.1} parent=0 // pred_region
    _
  $region37: #{policy_network_forward.1} parent=0 // pred_fallthru
    _

</llo_original>
